<compile_context>
chip_gen: v5e
topology: v5e:2x2
jax: 0.10.0
libtpu: 0.0.40
codegen_flags: <defaults>
</compile_context>

<pallas_src>
import jax
import jax.numpy as jnp
from jax.experimental import pallas as pl
from jax.experimental.pallas import tpu as pltpu


def _bahdanau_attn_kernel(q_ref, keys_ref,
                          wa_ref, ba_ref, ua_ref, bu_ref, va_ref,
                          ctx_ref, w_ref):
    Bt, S, H = keys_ref.shape

    q = q_ref[...]                            # (Bt, H)
    keys = keys_ref[...]                      # (Bt, S, H)

    # --- additive-attention energies: tanh(Wa q + Ua k) --------------------
    # Both Linear biases are folded into the small (Bt, H) term (one add total,
    # broadcast into the big (Bt, S, H) tensor below).
    q_wa = (jnp.dot(q, wa_ref[...], preferred_element_type=jnp.float32)
            + ba_ref[...] + bu_ref[...])                                      # (Bt, H)
    k_ua = jnp.dot(keys.reshape(Bt * S, H), ua_ref[...],
                   preferred_element_type=jnp.float32)                        # (Bt*S, H)
    e = jnp.tanh(q_wa[:, None, :] + k_ua.reshape(Bt, S, H))                   # (Bt, S, H)

    # --- scores = e @ va : H-reduction on the MXU, not the XLU -------------
    # Va's bias is intentionally omitted — it cancels in the softmax below.
    scores = jnp.dot(e.reshape(Bt * S, H), va_ref[...],
                     preferred_element_type=jnp.float32).reshape(Bt, S)       # (Bt, S)

    # --- softmax over source positions --------------------------------------
    m = jnp.max(scores, axis=-1, keepdims=True)
    ex = jnp.exp(scores - m)
    denom = jnp.sum(ex, axis=-1, keepdims=True)
    weights = ex * pl.reciprocal(denom, approx=True)                          # (Bt, S)

    # --- context = weights @ keys : batched matmul on the MXU ---------------
    ctx = jnp.einsum('bqs,bsh->bqh', weights[:, None, :], keys,
                     preferred_element_type=jnp.float32)                      # (Bt, 1, H)

    ctx_ref[...] = ctx[:, 0, :].astype(ctx_ref.dtype)
    w_ref[...] = weights.astype(w_ref.dtype)


def init_params(key, hidden_size):
    H = hidden_size
    ks = jax.random.split(key, 6)
    s = 0.2

    def rnd(k, shape):
        return (jax.random.normal(k, shape, jnp.float32) * s).astype(jnp.float32)

    # Weights stored already transposed w.r.t. torch's nn.Linear ((in, out) layout),
    # so the forward is x @ W + b.
    return dict(
        wa=rnd(ks[0], (H, H)), ba=rnd(ks[1], (1, H)),
        ua=rnd(ks[2], (H, H)), bu=rnd(ks[3], (1, H)),
        va=rnd(ks[4], (H, 1)),
        bv=rnd(ks[5], (1, 1)),   # kept for parameter parity; never used (cancels in softmax)
    )


def bahdanau_attention_forward(params, query, keys, *, batch_block=8):
    """query: (B, 1, H), keys: (B, S, H) -> (context (B,1,H), weights (B,1,S))."""
    B, S, H = keys.shape
    q2d = query.reshape(B, H).astype(jnp.float32)
    keys = keys.astype(jnp.float32)

    Bt = min(B, batch_block)
    grid = (pl.cdiv(B, Bt),)

    wa, ba = params["wa"], params["ba"].reshape(1, H)
    ua, bu = params["ua"], params["bu"].reshape(1, H)
    va = params["va"].reshape(H, 1)

    def rep_spec(shape):          # grid-invariant (weight) block
        nd = len(shape)
        return pl.BlockSpec(shape, lambda b, _nd=nd: (0,) * _nd)

    context, weights = pl.pallas_call(
        _bahdanau_attn_kernel,
        out_shape=(jax.ShapeDtypeStruct((B, H), jnp.float32),
                   jax.ShapeDtypeStruct((B, S), jnp.float32)),
        grid_spec=pltpu.PrefetchScalarGridSpec(
            num_scalar_prefetch=0,
            grid=grid,
            in_specs=[pl.BlockSpec((Bt, H), lambda b: (b, 0)),
                      pl.BlockSpec((Bt, S, H), lambda b: (b, 0, 0)),
                      rep_spec(wa.shape), rep_spec(ba.shape),
                      rep_spec(ua.shape), rep_spec(bu.shape),
                      rep_spec(va.shape)],
            out_specs=(pl.BlockSpec((Bt, H), lambda b: (b, 0)),
                       pl.BlockSpec((Bt, S), lambda b: (b, 0))),
        ),
        compiler_params=pltpu.CompilerParams(
            dimension_semantics=("parallel",),     # batch rows are independent
        ),
    )(q2d, keys, wa, ba, ua, bu, va)

    # back to the PyTorch module's output convention
    return context[:, None, :], weights[:, None, :]


def _reference(params, query, keys):
    """Pure-JAX replica of the PyTorch forward (including the Va bias)."""
    B, S, H = keys.shape
    q = query.reshape(B, H)
    q_wa = q @ params["wa"] + params["ba"].reshape(1, H)
    k_ua = keys @ params["ua"] + params["bu"].reshape(1, 1, H)
    e = jnp.tanh(q_wa[:, None, :] + k_ua)
    scores = (e @ params["va"].reshape(H, 1))[..., 0] + params["bv"].reshape(1, 1)
    weights = jax.nn.softmax(scores, axis=-1)
    context = jnp.einsum('bs,bsh->bh', weights, keys)
    return context[:, None, :], weights[:, None, :]


if __name__ == "__main__":
    B, S, H = 2, 8, 32

    key = jax.random.PRNGKey(0)
    k_par, k_q, k_k = jax.random.split(key, 3)

    params = init_params(k_par, hidden_size=H)
    query = jax.random.normal(k_q, (B, 1, H), jnp.float32)
    keys = jax.random.normal(k_k, (B, S, H), jnp.float32)

    context, weights = bahdanau_attention_forward(params, query, keys)
    jax.block_until_ready((context, weights))

    assert context.shape == (B, 1, H)
    assert weights.shape == (B, 1, S)
    assert bool(jnp.all(jnp.isfinite(context)))
    assert bool(jnp.all(jnp.isfinite(weights)))

    # correctness vs. pure-JAX reference (tolerance covers the EUP approx reciprocal)
    ref_ctx, ref_w = _reference(params, query, keys)
    assert bool(jnp.allclose(weights, ref_w, rtol=5e-3, atol=5e-3))
    assert bool(jnp.allclose(context, ref_ctx, rtol=5e-3, atol=5e-3))

    print("KERNEL_OK")
</pallas_src>

<mosaic_0001>
module attributes {stable_mosaic.version = 11 : i64} {
  func.func @_bahdanau_attn_kernel(%arg0: i32, %arg1: memref<2x32xf32, #tpu.memory_space<vmem>>, %arg2: memref<2x8x32xf32, #tpu.memory_space<vmem>>, %arg3: memref<32x32xf32, #tpu.memory_space<vmem>>, %arg4: memref<1x32xf32, #tpu.memory_space<vmem>>, %arg5: memref<32x32xf32, #tpu.memory_space<vmem>>, %arg6: memref<1x32xf32, #tpu.memory_space<vmem>>, %arg7: memref<32x1xf32, #tpu.memory_space<vmem>>, %arg8: memref<2x32xf32, #tpu.memory_space<vmem>>, %arg9: memref<2x8xf32, #tpu.memory_space<vmem>>) attributes {dimension_semantics = [#tpu.dimension_semantics<parallel>], iteration_bounds = array<i64: 1>, scalar_prefetch = 0 : i64, scratch_operands = 0 : i64, tpu.core_type = #tpu.core_type<tc>, window_params = [{transform_indices = @transform_0, window_bounds = array<i64: 2, 32>}, {transform_indices = @transform_1, window_bounds = array<i64: 2, 8, 32>}, {pipeline_mode = #tpu.pipeline_mode<synchronous>, transform_indices = @transform_2, window_bounds = array<i64: 32, 32>}, {pipeline_mode = #tpu.pipeline_mode<synchronous>, transform_indices = @transform_3, window_bounds = array<i64: 1, 32>}, {pipeline_mode = #tpu.pipeline_mode<synchronous>, transform_indices = @transform_4, window_bounds = array<i64: 32, 32>}, {pipeline_mode = #tpu.pipeline_mode<synchronous>, transform_indices = @transform_5, window_bounds = array<i64: 1, 32>}, {pipeline_mode = #tpu.pipeline_mode<synchronous>, transform_indices = @transform_6, window_bounds = array<i64: 32, 1>}, {transform_indices = @transform_7, window_bounds = array<i64: 2, 32>}, {transform_indices = @transform_8, window_bounds = array<i64: 2, 8>}]} {
    %c0 = arith.constant 0 : index
    %c0_0 = arith.constant 0 : index
    %0 = vector.load %arg1[%c0, %c0_0] : memref<2x32xf32, #tpu.memory_space<vmem>>, vector<2x32xf32>
    %c0_1 = arith.constant 0 : index
    %c0_2 = arith.constant 0 : index
    %c0_3 = arith.constant 0 : index
    %1 = vector.load %arg2[%c0_1, %c0_2, %c0_3] : memref<2x8x32xf32, #tpu.memory_space<vmem>>, vector<2x8x32xf32>
    %c0_4 = arith.constant 0 : index
    %c0_5 = arith.constant 0 : index
    %2 = vector.load %arg3[%c0_4, %c0_5] : memref<32x32xf32, #tpu.memory_space<vmem>>, vector<32x32xf32>
    %cst = arith.constant dense<0.000000e+00> : vector<2x32xf32>
    %3 = tpu.matmul %0, %2, %cst {dimension_numbers = #tpu.dot_dimension_numbers<[1], [0], [0], [1], [0, 0, 1, 1], [], []>} : vector<2x32xf32>, vector<32x32xf32>, vector<2x32xf32> -> vector<2x32xf32>
    %c0_6 = arith.constant 0 : index
    %c0_7 = arith.constant 0 : index
    %4 = vector.load %arg4[%c0_6, %c0_7] : memref<1x32xf32, #tpu.memory_space<vmem>>, vector<1x32xf32>
    %5 = vector.broadcast %4 : vector<1x32xf32> to vector<2x32xf32>
    %6 = arith.addf %3, %5 : vector<2x32xf32>
    %c0_8 = arith.constant 0 : index
    %c0_9 = arith.constant 0 : index
    %7 = vector.load %arg6[%c0_8, %c0_9] : memref<1x32xf32, #tpu.memory_space<vmem>>, vector<1x32xf32>
    %8 = vector.broadcast %7 : vector<1x32xf32> to vector<2x32xf32>
    %9 = arith.addf %6, %8 : vector<2x32xf32>
    %10 = vector.shape_cast %1 : vector<2x8x32xf32> to vector<16x32xf32>
    %c0_10 = arith.constant 0 : index
    %c0_11 = arith.constant 0 : index
    %11 = vector.load %arg5[%c0_10, %c0_11] : memref<32x32xf32, #tpu.memory_space<vmem>>, vector<32x32xf32>
    %cst_12 = arith.constant dense<0.000000e+00> : vector<16x32xf32>
    %12 = tpu.matmul %10, %11, %cst_12 {dimension_numbers = #tpu.dot_dimension_numbers<[1], [0], [0], [1], [0, 0, 1, 1], [], []>} : vector<16x32xf32>, vector<32x32xf32>, vector<16x32xf32> -> vector<16x32xf32>
    %13 = vector.shape_cast %9 : vector<2x32xf32> to vector<2x1x32xf32>
    %14 = vector.shape_cast %12 : vector<16x32xf32> to vector<2x8x32xf32>
    %15 = vector.broadcast %13 : vector<2x1x32xf32> to vector<2x8x32xf32>
    %16 = arith.addf %15, %14 : vector<2x8x32xf32>
    %17 = math.tanh %16 : vector<2x8x32xf32>
    %18 = vector.shape_cast %17 : vector<2x8x32xf32> to vector<16x32xf32>
    %c0_13 = arith.constant 0 : index
    %c0_14 = arith.constant 0 : index
    %19 = vector.load %arg7[%c0_13, %c0_14] : memref<32x1xf32, #tpu.memory_space<vmem>>, vector<32x1xf32>
    %cst_15 = arith.constant dense<0.000000e+00> : vector<16x1xf32>
    %20 = tpu.matmul %18, %19, %cst_15 {dimension_numbers = #tpu.dot_dimension_numbers<[1], [0], [0], [1], [0, 0, 1, 1], [], []>} : vector<16x32xf32>, vector<32x1xf32>, vector<16x1xf32> -> vector<16x1xf32>
    %21 = vector.shape_cast %20 : vector<16x1xf32> to vector<2x8xf32>
    %cst_16 = arith.constant dense<0xFF800000> : vector<2xf32>
    %22 = vector.multi_reduction <maximumf>, %21, %cst_16 [1] : vector<2x8xf32> to vector<2xf32>
    %23 = vector.shape_cast %22 : vector<2xf32> to vector<2x1xf32>
    %24 = vector.broadcast %23 : vector<2x1xf32> to vector<2x8xf32>
    %25 = arith.subf %21, %24 : vector<2x8xf32>
    %26 = math.exp %25 : vector<2x8xf32>
    %cst_17 = arith.constant dense<0.000000e+00> : vector<2xf32>
    %27 = vector.multi_reduction <add>, %26, %cst_17 [1] : vector<2x8xf32> to vector<2xf32>
    %28 = vector.shape_cast %27 : vector<2xf32> to vector<2x1xf32>
    %29 = tpu.reciprocal %28 {approx = true} : vector<2x1xf32> -> vector<2x1xf32>
    %30 = vector.broadcast %29 : vector<2x1xf32> to vector<2x8xf32>
    %31 = arith.mulf %26, %30 : vector<2x8xf32>
    %32 = vector.shape_cast %31 : vector<2x8xf32> to vector<2x1x8xf32>
    "tpu.trace_start"() <{level = 10 : i32, message = "bqs,bsh->bqh"}> : () -> ()
    %cst_18 = arith.constant dense<0.000000e+00> : vector<2x1x32xf32>
    %33 = tpu.matmul %32, %1, %cst_18 {dimension_numbers = #tpu.dot_dimension_numbers<[2], [1], [1], [2], [0, 0, 0, 1, 1, 2], [0], [0]>} : vector<2x1x8xf32>, vector<2x8x32xf32>, vector<2x1x32xf32> -> vector<2x1x32xf32>
    "tpu.trace_stop"() : () -> ()
    %34 = vector.shape_cast %33 : vector<2x1x32xf32> to vector<2x32xf32>
    %c0_19 = arith.constant 0 : index
    %c0_20 = arith.constant 0 : index
    %35 = vector.load %arg8[%c0_19, %c0_20] : memref<2x32xf32, #tpu.memory_space<vmem>>, vector<2x32xf32>
    tpu.vector_store %arg8[%c0_19, %c0_20], %34 {strides = array<i32>} : memref<2x32xf32, #tpu.memory_space<vmem>>, vector<2x32xf32>,
    %c0_21 = arith.constant 0 : index
    %c0_22 = arith.constant 0 : index
    %36 = vector.load %arg9[%c0_21, %c0_22] : memref<2x8xf32, #tpu.memory_space<vmem>>, vector<2x8xf32>
    tpu.vector_store %arg9[%c0_21, %c0_22], %31 {strides = array<i32>} : memref<2x8xf32, #tpu.memory_space<vmem>>, vector<2x8xf32>,
    return
  }
  func.func @transform_0(%arg0: i32) -> (i32, i32) {
    %c0_i32 = arith.constant 0 : i32
    %c0_i32_0 = arith.constant 0 : i32
    return %arg0, %c0_i32 : i32, i32
  }
  func.func @transform_1(%arg0: i32) -> (i32, i32, i32) {
    %c0_i32 = arith.constant 0 : i32
    %c0_i32_0 = arith.constant 0 : i32
    %c0_i32_1 = arith.constant 0 : i32
    return %arg0, %c0_i32, %c0_i32_0 : i32, i32, i32
  }
  func.func @transform_2(%arg0: i32) -> (i32, i32) {
    %c0_i32 = arith.constant 0 : i32
    %c0_i32_0 = arith.constant 0 : i32
    %c0_i32_1 = arith.constant 0 : i32
    return %c0_i32, %c0_i32_0 : i32, i32
  }
  func.func @transform_3(%arg0: i32) -> (i32, i32) {
    %c0_i32 = arith.constant 0 : i32
    %c0_i32_0 = arith.constant 0 : i32
    %c0_i32_1 = arith.constant 0 : i32
    return %c0_i32, %c0_i32_0 : i32, i32
  }
  func.func @transform_4(%arg0: i32) -> (i32, i32) {
    %c0_i32 = arith.constant 0 : i32
    %c0_i32_0 = arith.constant 0 : i32
    %c0_i32_1 = arith.constant 0 : i32
    return %c0_i32, %c0_i32_0 : i32, i32
  }
  func.func @transform_5(%arg0: i32) -> (i32, i32) {
    %c0_i32 = arith.constant 0 : i32
    %c0_i32_0 = arith.constant 0 : i32
    %c0_i32_1 = arith.constant 0 : i32
    return %c0_i32, %c0_i32_0 : i32, i32
  }
  func.func @transform_6(%arg0: i32) -> (i32, i32) {
    %c0_i32 = arith.constant 0 : i32
    %c0_i32_0 = arith.constant 0 : i32
    %c0_i32_1 = arith.constant 0 : i32
    return %c0_i32, %c0_i32_0 : i32, i32
  }
  func.func @transform_7(%arg0: i32) -> (i32, i32) {
    %c0_i32 = arith.constant 0 : i32
    %c0_i32_0 = arith.constant 0 : i32
    return %arg0, %c0_i32 : i32, i32
  }
  func.func @transform_8(%arg0: i32) -> (i32, i32) {
    %c0_i32 = arith.constant 0 : i32
    %c0_i32_0 = arith.constant 0 : i32
    return %arg0, %c0_i32 : i32, i32
  }
}

</mosaic_0001>

<llo_original>
// kernel: tpu_custom_call.1
$region0: #{tpu_custom_call.1}
  #allocation0 [shape = 'u32[]', space=smem, size = 0x4, offset = 0x4, fixed_abs, tag = 'smem constant byte address 0x4 - core index']
  #allocation1 [shape = 'u32[72,128]{1,0:T(1,128)}', space=vmem, size = 0x9000, scoped, tag = 'internal scratch']
  %s0 = inlined_call_operand.hbm [shape: f32[2,32], index: 0, kind: input, shape index: {}]
  %s1 = inlined_call_operand.hbm [shape: f32[2,8,32], index: 1, kind: input, shape index: {}]
  %s2 = inlined_call_operand.vmem [shape: f32[32,32], index: 2, kind: input, shape index: {}]
  %s3 = inlined_call_operand.vmem [shape: f32[1,32], index: 3, kind: input, shape index: {}]
  %s4 = inlined_call_operand.hbm [shape: f32[32,32], index: 4, kind: input, shape index: {}]
  %s5 = inlined_call_operand.vmem [shape: f32[1,32], index: 5, kind: input, shape index: {}]
  %s6 = inlined_call_operand.vmem [shape: f32[32,1], index: 6, kind: input, shape index: {}]
  %s7 = inlined_call_operand.hbm [shape: f32[2,32], index: 7, kind: output, shape index: {0}]
  %s8 = inlined_call_operand.hbm [shape: f32[2,8], index: 8, kind: output, shape index: {1}]
  %9 = xla_tuple %s7, %s8
  %s10 = sld [smem:[#allocation0]]
  $region58: #{tpu_custom_call.1} parent=0
    _
  %s12 = ssub.s32 1, %s10
  %s13 = scalar_select 0, %s12, %s10
  $region1: #{tpu_custom_call.1} parent=0
    #allocation2 [shape = 'u8[1024]{0}', space=vmem, size = 0x400, scoped, tag = 'input window, operand 0, single buffered']
    #allocation3 [shape = 's32[1]{0}', space=sflag, size = 0x4, scoped, tag = 'scoped memory for tpu_custom_call.1']
    #allocation4 [shape = 's32[1]{0}', space=sflag, size = 0x4, scoped, tag = 'scoped memory for tpu_custom_call.1']
    #allocation5 [shape = 'u8[8192]{0}', space=vmem, size = 0x2000, scoped, tag = 'input window, operand 1, single buffered']
    #allocation6 [shape = 's32[1]{0}', space=sflag, size = 0x4, scoped, tag = 'scoped memory for tpu_custom_call.1']
    #allocation7 [shape = 'u8[16384]{0}', space=vmem, size = 0x4000, scoped, tag = 'input window, operand 4, single buffered']
    #allocation8 [shape = 'u8[1024]{0}', space=vmem, size = 0x400, scoped, tag = 'output window, operand 0, single buffered']
    #allocation9 [shape = 'u8[1024]{0}', space=vmem, size = 0x400, scoped, tag = 'output window, operand 1, single buffered']
    #allocation10 [shape = 's32[1]{0}', space=sflag, size = 0x4, scoped, tag = 'scoped memory for tpu_custom_call.1']
    %14 = vsyncpa [#allocation3], 0
    %15 = vsyncpa [#allocation6], 0
    %16 = vsyncpa [#allocation4], 0
    %17 = vsyncpa [#allocation10], 0
    // Predicated region
    $region2: #{tpu_custom_call.1} parent=1 // pred_check
      _
    $region3: #{tpu_custom_call.1} parent=1 // pred_check_branch
      %19 = sbr.rel (0) target = $region5
    $region4: #{tpu_custom_call.1} parent=1 // pred_region
      %21 = vsyncadd [#allocation3], 0
      %s23 = sshll.u32 %s0, 4
      %s24 = int_to_ptr.hbm [resolvable:$true] %s23
      %s25 = sshll.u32 [#allocation2], 4
      %s26 = int_to_ptr.vmem [resolvable:$true] %s25
      %28 = dma.hbm_to_vmem [thread:$0]  %s24, 32, %s26, [#allocation3]
    $region5: #{tpu_custom_call.1} parent=1 // pred_fallthru
      _
    // Predicated region
    $region6: #{tpu_custom_call.1} parent=1 // pred_check
      _
    $region7: #{tpu_custom_call.1} parent=1 // pred_check_branch
      %30 = sbr.rel (0) target = $region9
    $region8: #{tpu_custom_call.1} parent=1 // pred_region
      %32 = vsyncadd [#allocation6], 0
      %s33 = sshll.u32 %s1, 4
      %s34 = int_to_ptr.hbm [resolvable:$true] %s33
      %s35 = sshll.u32 [#allocation5], 4
      %s36 = int_to_ptr.vmem [resolvable:$true] %s35
      %41 = dma.hbm_to_vmem [thread:$0]  %s34, 256, %s36, [#allocation6], 128, 128, 8
    $region9: #{tpu_custom_call.1} parent=1 // pred_fallthru
      _
    // Predicated region
    $region10: #{tpu_custom_call.1} parent=1 // pred_check
      _
    $region11: #{tpu_custom_call.1} parent=1 // pred_check_branch
      %43 = sbr.rel (0) target = $region13
    $region12: #{tpu_custom_call.1} parent=1 // pred_region
      _
    $region13: #{tpu_custom_call.1} parent=1 // pred_fallthru
      _
    // Predicated region
    $region14: #{tpu_custom_call.1} parent=1 // pred_check
      _
    $region15: #{tpu_custom_call.1} parent=1 // pred_check_branch
      %45 = sbr.rel (0) target = $region17
    $region16: #{tpu_custom_call.1} parent=1 // pred_region
      _
    $region17: #{tpu_custom_call.1} parent=1 // pred_fallthru
      _
    // Predicated region
    $region18: #{tpu_custom_call.1} parent=1 // pred_check
      _
    $region19: #{tpu_custom_call.1} parent=1 // pred_check_branch
      %47 = sbr.rel (0) target = $region21
    $region20: #{tpu_custom_call.1} parent=1 // pred_region
      %49 = vsyncadd [#allocation6], 0
      %s50 = sshll.u32 %s4, 4
      %s51 = int_to_ptr.hbm [resolvable:$true] %s50
      %s52 = sshll.u32 [#allocation7], 4
      %s53 = int_to_ptr.vmem [resolvable:$true] %s52
      %58 = dma.hbm_to_vmem [thread:$0]  %s51, 512, %s53, [#allocation6], 128, 128, 8
    $region21: #{tpu_custom_call.1} parent=1 // pred_fallthru
      _
    // Predicated region
    $region22: #{tpu_custom_call.1} parent=1 // pred_check
      _
    $region23: #{tpu_custom_call.1} parent=1 // pred_check_branch
      %60 = sbr.rel (0) target = $region25
    $region24: #{tpu_custom_call.1} parent=1 // pred_region
      _
    $region25: #{tpu_custom_call.1} parent=1 // pred_fallthru
      _
    // Predicated region
    $region26: #{tpu_custom_call.1} parent=1 // pred_check
      _
    $region27: #{tpu_custom_call.1} parent=1 // pred_check_branch
      %62 = sbr.rel (0) target = $region29
    $region28: #{tpu_custom_call.1} parent=1 // pred_region
      _
    $region29: #{tpu_custom_call.1} parent=1 // pred_fallthru
      _
    // Predicated region
    $region30: #{tpu_custom_call.1} parent=1 // pred_check
      _
    $region31: #{tpu_custom_call.1} parent=1 // pred_check_branch
      %64 = sbr.rel (0) target = $region33
    $region32: #{tpu_custom_call.1} parent=1 // pred_region
      %66 = dma.done [#allocation3], 32
    $region33: #{tpu_custom_call.1} parent=1 // pred_fallthru
      _
    // Predicated region
    $region34: #{tpu_custom_call.1} parent=1 // pred_check
      _
    $region35: #{tpu_custom_call.1} parent=1 // pred_check_branch
      %68 = sbr.rel (0) target = $region37
    $region36: #{tpu_custom_call.1} parent=1 // pred_region
      %70 = dma.done [#allocation6], 256
    $region37: #{tpu_custom_call.1} parent=1 // pred_fallthru
      _
    // Predicated region
    $region38: #{tpu_custom_call.1} parent=1 // pred_check
      _
    $region39: #{tpu_custom_call.1} parent=1 // pred_check_branch
      %72 = sbr.rel (0) target = $region41
    $region40: #{tpu_custom_call.1} parent=1 // pred_region
      %74 = dma.done [#allocation6], 512
    $region41: #{tpu_custom_call.1} parent=1 // pred_fallthru
      _
    %v75 = vld [vmem:[#allocation2] sm:$0x3]
    %v76 = vld [vmem:[#allocation5] sm:$0xff]
    %v77 = vld [vmem:[#allocation5 + $0x8] sm:$0xff]
    %v78 = vld [vmem:[%s2] sm:$0xff]
    %v79 = vld [vmem:[%s2 + $0x8] sm:$0xff]
    %v80 = vld [vmem:[%s2 + $0x10] sm:$0xff]
    %v81 = vld [vmem:[%s2 + $0x18] sm:$0xff]
    %v82 = vld [vmem:[%s3] sm:$0x1]
    %v84 = vperm.slane %v82, 0
    %vm86 = vcmask 261120
    %v88 = vsel %vm86, %v75, 0
    %90 = vmatpush.msra.mxu0 0.0
    %91 = vmatpush.msra.mxu0 0.0
    %92 = vmatpush.msra.mxu0 0.0
    %93 = vmatpush.msra.mxu0 0.0
    %94 = vmatpush.msra.mxu0 0.0
    %95 = vmatpush.msra.mxu0 0.0
    %96 = vmatpush.msra.mxu0 0.0
    %97 = vmatpush.msra.mxu0 0.0
    %98 = vmatpush.msra.mxu0 0.0
    %99 = vmatpush.msra.mxu0 0.0
    %100 = vmatpush.msra.mxu0 0.0
    %101 = vmatpush.msra.mxu0 0.0
    %102 = vmatpush.msra.mxu0 %v81
    %103 = vmatpush.msra.mxu0 %v80
    %104 = vmatpush.msra.mxu0 %v79
    %105 = vmatpush.msra.mxu0 %v78
    %106 = vmatmul.f32.gmra.mxu0 %v88
    %v107 = vpop.f32.mrf.mxu0
    %v108 = vadd.f32 %v84, %v107
    %109 = vdwg.mxu0
    %v110 = vld [vmem:[%s5] sm:$0x1]
    %v112 = vperm.slane %v110, 0
    %v114 = vadd.f32 %v108, %v112
    %v115 = vld [vmem:[#allocation7] sm:$0xff]
    %v116 = vld [vmem:[#allocation7 + $0x8] sm:$0xff]
    %v117 = vld [vmem:[#allocation7 + $0x10] sm:$0xff]
    %v118 = vld [vmem:[#allocation7 + $0x18] sm:$0xff]
    %v120 = vsel %vm86, %v76, 0
    %v123 = vsel %vm86, %v77, 0
    %125 = vmatpush.msra.mxu0 0.0
    %126 = vmatpush.msra.mxu0 0.0
    %127 = vmatpush.msra.mxu0 0.0
    %128 = vmatpush.msra.mxu0 0.0
    %129 = vmatpush.msra.mxu0 0.0
    %130 = vmatpush.msra.mxu0 0.0
    %131 = vmatpush.msra.mxu0 0.0
    %132 = vmatpush.msra.mxu0 0.0
    %133 = vmatpush.msra.mxu0 0.0
    %134 = vmatpush.msra.mxu0 0.0
    %135 = vmatpush.msra.mxu0 0.0
    %136 = vmatpush.msra.mxu0 0.0
    %137 = vmatpush.msra.mxu0 %v118
    %138 = vmatpush.msra.mxu0 %v117
    %139 = vmatpush.msra.mxu0 %v116
    %140 = vmatpush.msra.mxu0 %v115
    %141 = vmatmul.f32.gmra.mxu0 %v120
    %v142 = vpop.f32.mrf.mxu0
    %v143 = vadd.f32 0.0, %v142
    %144 = vmatmul.f32.gmra.mxu0 %v123
    %v145 = vpop.f32.mrf.mxu0
    %v146 = vadd.f32 0.0, %v145
    %147 = vdwg.mxu0
    %v149 = vrot.slane %v114, 1
    %v150 = vperm.slane %v114, 0
    %v151 = vperm.slane %v149, 0
    %v154 = vadd.f32 %v150, %v143
    %v155 = vadd.f32 %v151, %v146
    %v156 = vtanh.pop %v154
    %v157 = vtanh.pop %v155
    %v158 = vld [vmem:[%s6] sm:$0xff]
    %v159 = vld [vmem:[%s6 + $0x8] sm:$0xff]
    %v160 = vld [vmem:[%s6 + $0x10] sm:$0xff]
    %v161 = vld [vmem:[%s6 + $0x18] sm:$0xff]
    %v163 = vsel %vm86, %v156, 0
    %v166 = vsel %vm86, %v157, 0
    %168 = vmatpush.msra.mxu0 0.0
    %169 = vmatpush.msra.mxu0 0.0
    %170 = vmatpush.msra.mxu0 0.0
    %171 = vmatpush.msra.mxu0 0.0
    %172 = vmatpush.msra.mxu0 0.0
    %173 = vmatpush.msra.mxu0 0.0
    %174 = vmatpush.msra.mxu0 0.0
    %175 = vmatpush.msra.mxu0 0.0
    %176 = vmatpush.msra.mxu0 0.0
    %177 = vmatpush.msra.mxu0 0.0
    %178 = vmatpush.msra.mxu0 0.0
    %179 = vmatpush.msra.mxu0 0.0
    %180 = vmatpush.msra.mxu0 %v161
    %181 = vmatpush.msra.mxu0 %v160
    %182 = vmatpush.msra.mxu0 %v159
    %183 = vmatpush.msra.mxu0 %v158
    %184 = vmatmul.f32.gmra.mxu0 %v163
    %v185 = vpop.f32.mrf.mxu0
    %v186 = vadd.f32 0.0, %v185
    %187 = vmatmul.f32.gmra.mxu0 %v166
    %v188 = vpop.f32.mrf.mxu0
    %v189 = vadd.f32 0.0, %v188
    %190 = vdwg.mxu0
    %193 = vset.pattern.permute.xlu0 0
    %194 = vperm.xlu0 %193, %v186
    %v195 = vpop.permute.xlu0 %194
    %196 = vset.pattern.permute.xlu0 0
    %197 = vperm.xlu0 %196, %v189
    %v198 = vpop.permute.xlu0 %197
    %v199 = vlaneseq
    %v200 = vand.u32 %v199, 127
    %v201 = vperm.slane %v195, %v200
    %v202 = vperm.slane %v198, %v200
    %vm203 = vcmask 1041409
    %v204 = vsel %vm203, %v202, %v201
    %vm206 = vcmask 58368
    %v207 = vsel %vm206, %v204, -inf
    %208 = vmax.xlane.f32.xlu0 %v207
    %v209 = vpop.xlane.xlu0 %208
    %v211 = vperm.slane %v209, 0
    %v212 = vperm.slane %v209, 1
    %v215 = vsub.f32 %v186, %v211
    %v216 = vsub.f32 %v189, %v212
    %v217 = vmul.f32 %v215, 1.442695
    %v218 = vpow.pop %v217
    %v219 = vmul.f32 %v216, 1.442695
    %v220 = vpow.pop %v219
    %223 = vset.pattern.permute.xlu0 0
    %224 = vperm.xlu0 %223, %v218
    %v225 = vpop.permute.xlu0 %224
    %226 = vset.pattern.permute.xlu0 0
    %227 = vperm.xlu0 %226, %v220
    %v228 = vpop.permute.xlu0 %227
    %v229 = vperm.slane %v225, %v200
    %v230 = vperm.slane %v228, %v200
    %v231 = vsel %vm203, %v230, %v229
    %v233 = vsel %vm206, %v231, 0.0
    %234 = vadd.xlane.f32.xlu0 %v233
    %v235 = vpop.xlane.xlu0 %234
    %v236 = vrcp.pop %v235
    %v238 = vperm.slane %v236, 0
    %v239 = vperm.slane %v236, 1
    %v242 = vmul.f32 %v218, %v238
    %v243 = vmul.f32 %v220, %v239
    %245 = vset.pattern.permute.xlu0 0
    %246 = vperm.xlu0 %245, %v242
    %v247 = vpop.permute.xlu0 %246
    %v248 = vperm.slane %v247, %v200
    %vm249 = vcmask 64512
    %v250 = vsel %vm249, %v248, 0
    %252 = vmatpush.msra.mxu0 0.0
    %253 = vmatpush.msra.mxu0 0.0
    %254 = vmatpush.msra.mxu0 0.0
    %255 = vmatpush.msra.mxu0 0.0
    %256 = vmatpush.msra.mxu0 0.0
    %257 = vmatpush.msra.mxu0 0.0
    %258 = vmatpush.msra.mxu0 0.0
    %259 = vmatpush.msra.mxu0 0.0
    %260 = vmatpush.msra.mxu0 0.0
    %261 = vmatpush.msra.mxu0 0.0
    %262 = vmatpush.msra.mxu0 0.0
    %263 = vmatpush.msra.mxu0 0.0
    %264 = vmatpush.msra.mxu0 0.0
    %265 = vmatpush.msra.mxu0 0.0
    %266 = vmatpush.msra.mxu0 0.0
    %267 = vmatpush.msra.mxu0 %v76
    %268 = vmatmul.f32.gmra.mxu0 %v250
    %v269 = vpop.f32.mrf.mxu0
    %v270 = vadd.f32 0.0, %v269
    %271 = vdwg.mxu0
    %273 = vset.pattern.permute.xlu0 0
    %274 = vperm.xlu0 %273, %v243
    %v275 = vpop.permute.xlu0 %274
    %v276 = vperm.slane %v275, %v200
    %v277 = vsel %vm249, %v276, 0
    %279 = vmatpush.msra.mxu0 0.0
    %280 = vmatpush.msra.mxu0 0.0
    %281 = vmatpush.msra.mxu0 0.0
    %282 = vmatpush.msra.mxu0 0.0
    %283 = vmatpush.msra.mxu0 0.0
    %284 = vmatpush.msra.mxu0 0.0
    %285 = vmatpush.msra.mxu0 0.0
    %286 = vmatpush.msra.mxu0 0.0
    %287 = vmatpush.msra.mxu0 0.0
    %288 = vmatpush.msra.mxu0 0.0
    %289 = vmatpush.msra.mxu0 0.0
    %290 = vmatpush.msra.mxu0 0.0
    %291 = vmatpush.msra.mxu0 0.0
    %292 = vmatpush.msra.mxu0 0.0
    %293 = vmatpush.msra.mxu0 0.0
    %294 = vmatpush.msra.mxu0 %v77
    %295 = vmatmul.f32.gmra.mxu0 %v277
    %v296 = vpop.f32.mrf.mxu0
    %v297 = vadd.f32 0.0, %v296
    %298 = vdwg.mxu0
    %v301 = vrot.slane %v297, 7
    %v302 = vsel %vm203, %v301, %v270
    %vm304 = vcmask 254976
    %305 = vst.msk [vmem:[#allocation8] sm:$0x3] %vm304, %v302
    %v306 = vsel %vm203, %v276, %v248
    %308 = vst.msk [vmem:[#allocation9] sm:$0x3] %vm206, %v306
    // Predicated region
    $region42: #{tpu_custom_call.1} parent=1 // pred_check
      _
    $region43: #{tpu_custom_call.1} parent=1 // pred_check_branch
      %310 = sbr.rel (0) target = $region45
    $region44: #{tpu_custom_call.1} parent=1 // pred_region
      %312 = vsyncadd [#allocation4], 0
      %s314 = sshll.u32 [#allocation8], 4
      %s315 = int_to_ptr.vmem [resolvable:$true] %s314
      %s316 = sshll.u32 %s7, 4
      %s317 = int_to_ptr.hbm [resolvable:$true] %s316
      %319 = dma.vmem_to_hbm [thread:$0]  %s315, 32, %s317, [#allocation4]
    $region45: #{tpu_custom_call.1} parent=1 // pred_fallthru
      _
    // Predicated region
    $region46: #{tpu_custom_call.1} parent=1 // pred_check
      _
    $region47: #{tpu_custom_call.1} parent=1 // pred_check_branch
      %321 = sbr.rel (0) target = $region49
    $region48: #{tpu_custom_call.1} parent=1 // pred_region
      %323 = vsyncadd [#allocation10], 0
      %s325 = sshll.u32 [#allocation9], 4
      %s326 = int_to_ptr.vmem [resolvable:$true] %s325
      %s327 = sshll.u32 %s8, 4
      %s328 = int_to_ptr.hbm [resolvable:$true] %s327
      %330 = dma.vmem_to_hbm [thread:$0]  %s326, 32, %s328, [#allocation10]
    $region49: #{tpu_custom_call.1} parent=1 // pred_fallthru
      _
    // Predicated region
    $region50: #{tpu_custom_call.1} parent=1 // pred_check
      _
    $region51: #{tpu_custom_call.1} parent=1 // pred_check_branch
      %332 = sbr.rel (0) target = $region53
    $region52: #{tpu_custom_call.1} parent=1 // pred_region
      %334 = dma.done [#allocation4], 32
    $region53: #{tpu_custom_call.1} parent=1 // pred_fallthru
      _
    // Predicated region
    $region54: #{tpu_custom_call.1} parent=1 // pred_check
      _
    $region55: #{tpu_custom_call.1} parent=1 // pred_check_branch
      %336 = sbr.rel (0) target = $region57
    $region56: #{tpu_custom_call.1} parent=1 // pred_region
      %338 = dma.done [#allocation10], 32
    $region57: #{tpu_custom_call.1} parent=1 // pred_fallthru
      _
    %339 = vsyncpa [#allocation3], 1
    %340 = vsyncpa [#allocation6], 1
    %341 = vsyncpa [#allocation4], 1
    %342 = vsyncpa [#allocation10], 1

</llo_original>
